<compile_context>
chip_gen: v7x
topology: tpu7x:2x2x1
jax: 0.10.0
libtpu: 0.0.40
codegen_flags: <defaults>
</compile_context>

<pallas_src>
import functools

import jax
import jax.numpy as jnp
from jax.experimental import pallas as pl
from jax.experimental.pallas import tpu as pltpu


def _f1_tile_kernel(logits_ref, target_ref, out_ref, *, hw, eps):
    """One pixel tile.

    logits_ref: (N, C, TP) float block  (channels on sublanes, pixels on lanes)
    target_ref: (N, TP)    int32 block
    out_ref:    (1, TP)    float32 block: per-pixel-column sum over classes of the
                clamped soft-F1 (zero for padded columns past `hw`).
    """
    i = pl.program_id(0)
    logits = logits_ref[...].astype(jnp.float32)            # (N, C, TP)
    tgt = target_ref[...].astype(jnp.int32)                  # (N, TP)
    n, c, tp = logits.shape

    # Valid-pixel mask for the ragged last tile (no wrapper-side padding copy).
    col = jax.lax.broadcasted_iota(jnp.int32, (1, tp), 1) + i * tp
    valid = col < hw                                          # (1, TP) bool

    # Zero garbage logits in out-of-bounds columns *before* exp so the softmax
    # stays finite there (those columns are masked out of the output below).
    logits = jnp.where(valid[:, None, :], logits, 0.0)

    # Softmax over the channel (sublane) axis.
    m = jnp.max(logits, axis=1, keepdims=True)                # (N, 1, TP)
    e = jnp.exp(logits - m)                                   # (N, C, TP)
    inv_denom = 1.0 / jnp.sum(e, axis=1, keepdims=True)       # (N, 1, TP)
    p = e * inv_denom                                         # (N, C, TP)

    # One-hot of the target class: VPU compare against a channel iota (no MXU).
    cls = jax.lax.broadcasted_iota(jnp.int32, (n, c, tp), 1)  # (N, C, TP)
    onehot = (cls == tgt[:, None, :]).astype(jnp.float32)     # (N, C, TP)

    # Batch-reduced confusion statistics, per (class, pixel column).
    tp_ = jnp.sum(onehot * p, axis=0)                         # (C, TP) true positives
    s_ = jnp.sum(p, axis=0)                                   # (C, TP) tp + fp
    t_ = jnp.sum(onehot, axis=0)                              # (C, TP) tp + fn

    # f1 = 2PR/(P+R+eps) with P = tp/(S+eps), R = tp/(T+eps); exact algebraic
    # rewrite with a single division per element:
    #   f1 = 2*tp^2 / (tp*(S+T+2*eps) + eps*(S+eps)*(T+eps))
    num = 2.0 * tp_ * tp_
    den = tp_ * (s_ + t_ + 2.0 * eps) + eps * (s_ + eps) * (t_ + eps)
    f1 = jnp.clip(num / den, eps, 1.0 - eps)                  # (C, TP)

    colsum = jnp.sum(f1, axis=0, keepdims=True)               # (1, TP)
    out_ref[...] = jnp.where(valid, colsum, 0.0)


def f1_loss(y_pred, y_true, *, epsilon=1e-7, block_bytes=1 << 20):
    """Pallas TPU implementation of F1Loss.forward.

    y_pred: (N, C, H, W) float logits; y_true: (N, H, W) integer class ids.
    """
    assert y_pred.ndim == 4 and y_true.ndim == 3
    n, c, h, w = y_pred.shape
    hw = h * w

    # NCHW -> (N, C, HW): free reshape (contiguous), no transpose, no pad.
    logits = y_pred.reshape(n, c, hw)
    targets = y_true.reshape(n, hw).astype(jnp.int32)

    # Lane-dense pixel tile: ~block_bytes of f32 logits per grid step, a multiple
    # of 128, capped at the (rounded-up) pixel count.  ~1 MiB blocks keep
    # double-buffered inputs + temps well inside every generation's VMEM budget.
    tile_p = max(128, (block_bytes // (n * c * 4)) // 128 * 128)
    tile_p = min(tile_p, pl.cdiv(hw, 128) * 128)
    num_tiles = pl.cdiv(hw, tile_p)

    kernel = functools.partial(_f1_tile_kernel, hw=hw, eps=float(epsilon))
    per_col = pl.pallas_call(
        kernel,
        out_shape=jax.ShapeDtypeStruct((1, num_tiles * tile_p), jnp.float32),
        grid_spec=pltpu.PrefetchScalarGridSpec(
            num_scalar_prefetch=0,
            grid=(num_tiles,),
            in_specs=[
                pl.BlockSpec((n, c, tile_p), lambda i: (0, 0, i)),  # logits
                pl.BlockSpec((n, tile_p), lambda i: (0, i)),        # targets
            ],
            out_specs=pl.BlockSpec((1, tile_p), lambda i: (0, i)),
        ),
        compiler_params=pltpu.CompilerParams(
            dimension_semantics=("parallel",)),   # independent tiles -> megacore on v7x
    )(logits, targets)

    # Mean over the (C, H, W) soft-F1 map; padded columns contribute exactly 0.
    f1_mean = jnp.sum(per_col) / (c * hw)
    return 1.0 - f1_mean


def _reference_f1_loss(y_pred, y_true, *, classes, epsilon=1e-7):
    """Pure-JAX reference mirroring the PyTorch F1Loss module line-by-line."""
    p = jax.nn.softmax(y_pred.astype(jnp.float32), axis=1)               # (N,C,H,W)
    onehot = jax.nn.one_hot(y_true, classes, axis=1, dtype=jnp.float32)  # (N,C,H,W)
    tp = jnp.sum(onehot * p, axis=0)
    fp = jnp.sum((1.0 - onehot) * p, axis=0)
    fn = jnp.sum(onehot * (1.0 - p), axis=0)
    precision = tp / (tp + fp + epsilon)
    recall = tp / (tp + fn + epsilon)
    f1 = 2.0 * precision * recall / (precision + recall + epsilon)
    f1 = jnp.clip(f1, epsilon, 1.0 - epsilon)
    return 1.0 - jnp.mean(f1)


if __name__ == "__main__":
    key = jax.random.PRNGKey(0)
    k1, k2 = jax.random.split(key)

    N, C, H, W = 2, 12, 16, 16
    y_pred = jax.random.normal(k1, (N, C, H, W), dtype=jnp.float32)
    y_true = jax.random.randint(k2, (N, H, W), 0, C, dtype=jnp.int32)

    loss = jax.block_until_ready(f1_loss(y_pred, y_true))
    ref = jax.block_until_ready(_reference_f1_loss(y_pred, y_true, classes=C))
    assert jnp.allclose(loss, ref, rtol=1e-5, atol=1e-5), (loss, ref)

    print("KERNEL_OK")
</pallas_src>

<mosaic_0001>
module attributes {stable_mosaic.version = 11 : i64} {
  func.func @_f1_tile_kernel(%arg0: i32, %arg1: memref<2x12x256xf32, #tpu.memory_space<vmem>>, %arg2: memref<2x256xi32, #tpu.memory_space<vmem>>, %arg3: memref<1x256xf32, #tpu.memory_space<vmem>>) attributes {dimension_semantics = [#tpu.dimension_semantics<parallel>], iteration_bounds = array<i64: 1>, scalar_prefetch = 0 : i64, scratch_operands = 0 : i64, tpu.core_type = #tpu.core_type<tc>, window_params = [{transform_indices = @transform_0, window_bounds = array<i64: 2, 12, 256>}, {transform_indices = @transform_1, window_bounds = array<i64: 2, 256>}, {transform_indices = @transform_2, window_bounds = array<i64: 1, 256>}]} {
    %c0 = arith.constant 0 : index
    %c0_0 = arith.constant 0 : index
    %c0_1 = arith.constant 0 : index
    %0 = vector.load %arg1[%c0, %c0_0, %c0_1] : memref<2x12x256xf32, #tpu.memory_space<vmem>>, vector<2x12x256xf32>
    %c0_2 = arith.constant 0 : index
    %c0_3 = arith.constant 0 : index
    %1 = vector.load %arg2[%c0_2, %c0_3] : memref<2x256xi32, #tpu.memory_space<vmem>>, vector<2x256xi32>
    %2 = tpu.iota {dimensions = array<i32: 1>} : vector<1x256xi32>
    %c256_i32 = arith.constant 256 : i32
    %3 = arith.muli %arg0, %c256_i32 : i32
    %4 = vector.broadcast %3 : i32 to vector<1x256xi32>
    %5 = arith.addi %2, %4 : vector<1x256xi32>
    %c256_i32_4 = arith.constant 256 : i32
    %6 = vector.broadcast %c256_i32_4 : i32 to vector<1x256xi32>
    %7 = arith.cmpi slt, %5, %6 : vector<1x256xi32>
    %8 = vector.shape_cast %7 : vector<1x256xi1> to vector<1x1x256xi1>
    %cst = arith.constant 0.000000e+00 : f32
    %9 = vector.shape_cast %8 : vector<1x1x256xi1> to vector<1x1x256xi1>
    %10 = vector.broadcast %9 : vector<1x1x256xi1> to vector<2x12x256xi1>
    %11 = vector.broadcast %cst : f32 to vector<2x12x256xf32>
    %12 = arith.select %10, %0, %11 : vector<2x12x256xi1>, vector<2x12x256xf32>
    %cst_5 = arith.constant dense<0xFF800000> : vector<2x256xf32>
    %13 = vector.multi_reduction <maximumf>, %12, %cst_5 [1] : vector<2x12x256xf32> to vector<2x256xf32>
    %14 = vector.shape_cast %13 : vector<2x256xf32> to vector<2x1x256xf32>
    %15 = vector.broadcast %14 : vector<2x1x256xf32> to vector<2x12x256xf32>
    %16 = arith.subf %12, %15 : vector<2x12x256xf32>
    %17 = math.exp %16 : vector<2x12x256xf32>
    %cst_6 = arith.constant dense<0.000000e+00> : vector<2x256xf32>
    %18 = vector.multi_reduction <add>, %17, %cst_6 [1] : vector<2x12x256xf32> to vector<2x256xf32>
    %19 = vector.shape_cast %18 : vector<2x256xf32> to vector<2x1x256xf32>
    %cst_7 = arith.constant 1.000000e+00 : f32
    %20 = vector.broadcast %cst_7 : f32 to vector<2x1x256xf32>
    %21 = arith.divf %20, %19 : vector<2x1x256xf32>
    %22 = vector.broadcast %21 : vector<2x1x256xf32> to vector<2x12x256xf32>
    %23 = arith.mulf %17, %22 : vector<2x12x256xf32>
    %24 = tpu.iota {dimensions = array<i32: 1>} : vector<2x12x256xi32>
    %25 = vector.shape_cast %1 : vector<2x256xi32> to vector<2x1x256xi32>
    %26 = vector.broadcast %25 : vector<2x1x256xi32> to vector<2x12x256xi32>
    %27 = arith.cmpi eq, %24, %26 : vector<2x12x256xi32>
    %28 = arith.extui %27 : vector<2x12x256xi1> to vector<2x12x256xi32>
    %29 = arith.sitofp %28 : vector<2x12x256xi32> to vector<2x12x256xf32>
    %30 = arith.mulf %29, %23 : vector<2x12x256xf32>
    %cst_8 = arith.constant dense<0.000000e+00> : vector<12x256xf32>
    %31 = vector.multi_reduction <add>, %30, %cst_8 [0] : vector<2x12x256xf32> to vector<12x256xf32>
    %cst_9 = arith.constant dense<0.000000e+00> : vector<12x256xf32>
    %32 = vector.multi_reduction <add>, %23, %cst_9 [0] : vector<2x12x256xf32> to vector<12x256xf32>
    %cst_10 = arith.constant dense<0.000000e+00> : vector<12x256xf32>
    %33 = vector.multi_reduction <add>, %29, %cst_10 [0] : vector<2x12x256xf32> to vector<12x256xf32>
    %cst_11 = arith.constant 2.000000e+00 : f32
    %34 = vector.broadcast %cst_11 : f32 to vector<12x256xf32>
    %35 = arith.mulf %34, %31 : vector<12x256xf32>
    %36 = arith.mulf %35, %31 : vector<12x256xf32>
    %37 = arith.addf %32, %33 : vector<12x256xf32>
    %cst_12 = arith.constant 2.000000e-07 : f32
    %38 = vector.broadcast %cst_12 : f32 to vector<12x256xf32>
    %39 = arith.addf %37, %38 : vector<12x256xf32>
    %40 = arith.mulf %31, %39 : vector<12x256xf32>
    %cst_13 = arith.constant 1.000000e-07 : f32
    %41 = vector.broadcast %cst_13 : f32 to vector<12x256xf32>
    %42 = arith.addf %32, %41 : vector<12x256xf32>
    %cst_14 = arith.constant 1.000000e-07 : f32
    %43 = vector.broadcast %cst_14 : f32 to vector<12x256xf32>
    %44 = arith.mulf %43, %42 : vector<12x256xf32>
    %cst_15 = arith.constant 1.000000e-07 : f32
    %45 = vector.broadcast %cst_15 : f32 to vector<12x256xf32>
    %46 = arith.addf %33, %45 : vector<12x256xf32>
    %47 = arith.mulf %44, %46 : vector<12x256xf32>
    %48 = arith.addf %40, %47 : vector<12x256xf32>
    %49 = arith.divf %36, %48 : vector<12x256xf32>
    %cst_16 = arith.constant 1.000000e-07 : f32
    %cst_17 = arith.constant 0.99999988 : f32
    %50 = vector.broadcast %cst_16 : f32 to vector<12x256xf32>
    %51 = arith.maximumf %50, %49 : vector<12x256xf32>
    %52 = vector.broadcast %cst_17 : f32 to vector<12x256xf32>
    %53 = arith.minimumf %52, %51 : vector<12x256xf32>
    %cst_18 = arith.constant dense<0.000000e+00> : vector<256xf32>
    %54 = vector.multi_reduction <add>, %53, %cst_18 [0] : vector<12x256xf32> to vector<256xf32>
    %55 = vector.shape_cast %54 : vector<256xf32> to vector<1x256xf32>
    %cst_19 = arith.constant 0.000000e+00 : f32
    %56 = vector.broadcast %cst_19 : f32 to vector<1x256xf32>
    %57 = arith.select %7, %55, %56 : vector<1x256xi1>, vector<1x256xf32>
    %c0_20 = arith.constant 0 : index
    %c0_21 = arith.constant 0 : index
    %58 = vector.load %arg3[%c0_20, %c0_21] : memref<1x256xf32, #tpu.memory_space<vmem>>, vector<1x256xf32>
    tpu.vector_store %arg3[%c0_20, %c0_21], %57 {strides = array<i32>} : memref<1x256xf32, #tpu.memory_space<vmem>>, vector<1x256xf32>,
    return
  }
  func.func @transform_0(%arg0: i32) -> (i32, i32, i32) {
    %c0_i32 = arith.constant 0 : i32
    %c0_i32_0 = arith.constant 0 : i32
    %c0_i32_1 = arith.constant 0 : i32
    return %c0_i32, %c0_i32_0, %arg0 : i32, i32, i32
  }
  func.func @transform_1(%arg0: i32) -> (i32, i32) {
    %c0_i32 = arith.constant 0 : i32
    %c0_i32_0 = arith.constant 0 : i32
    return %c0_i32, %arg0 : i32, i32
  }
  func.func @transform_2(%arg0: i32) -> (i32, i32) {
    %c0_i32 = arith.constant 0 : i32
    %c0_i32_0 = arith.constant 0 : i32
    return %c0_i32, %arg0 : i32, i32
  }
}

</mosaic_0001>

<llo_original>
// kernel: tpu_custom_call.1
$region0: #{tpu_custom_call.1}
  #allocation0 [shape = 'u32[]', space=smem, size = 0x4, offset = 0x4, fixed_abs, tag = 'smem constant byte address 0x4 - core index']
  #allocation1 [shape = 'u32[144,128]{1,0:T(1,128)}', space=vmem, size = 0x12000, scoped, tag = 'internal scratch']
  %s0 = inlined_call_operand.vmem [shape: f32[2,12,256], index: 0, kind: input, shape index: {}]
  %s1 = inlined_call_operand.vmem [shape: s32[2,256], index: 1, kind: input, shape index: {}]
  %s2 = inlined_call_operand.hbm [shape: f32[1,256], index: 2, kind: output, shape index: {}]
  %s3 = sld [smem:[#allocation0]]
  $region18: #{tpu_custom_call.1} parent=0
    _
  %s5 = ssub.s32 1, %s3
  %s6 = scalar_select 0, %s5, %s3
  $region1: #{tpu_custom_call.1} parent=0
    #allocation2 [shape = 'u8[1024]{0}', space=vmem, size = 0x400, scoped, tag = 'output window, operand 0, single buffered']
    #allocation3 [shape = 's32[1]{0}', space=sflag, size = 0x4, scoped, tag = 'scoped memory for tpu_custom_call.1']
    %7 = vsyncpa [#allocation3], 0
    // Predicated region
    $region2: #{tpu_custom_call.1} parent=1 // pred_check
      _
    $region3: #{tpu_custom_call.1} parent=1 // pred_check_branch
      %9 = sbr.rel (0) target = $region5
    $region4: #{tpu_custom_call.1} parent=1 // pred_region
      _
    $region5: #{tpu_custom_call.1} parent=1 // pred_fallthru
      _
    // Predicated region
    $region6: #{tpu_custom_call.1} parent=1 // pred_check
      _
    $region7: #{tpu_custom_call.1} parent=1 // pred_check_branch
      %11 = sbr.rel (0) target = $region9
    $region8: #{tpu_custom_call.1} parent=1 // pred_region
      _
    $region9: #{tpu_custom_call.1} parent=1 // pred_fallthru
      _
    %v12 = vld [vmem:[%s0] sm:$0xff]
    %v13 = vld [vmem:[%s0 + $0x8] sm:$0xff]
    %v14 = vld [vmem:[%s0 + $0x10] sm:$0xf]
    %v15 = vld [vmem:[%s0 + $0x18] sm:$0xf]
    %v16 = vld [vmem:[%s0 + $0x20] sm:$0xff]
    %v17 = vld [vmem:[%s0 + $0x28] sm:$0xff]
    %v18 = vld [vmem:[%s0 + $0x30] sm:$0xf]
    %v19 = vld [vmem:[%s0 + $0x38] sm:$0xf]
    %v20 = vld [vmem:[%s1] sm:$0xf]
    %v21 = vlaneseq
    %v22 = vand.u32 %v21, 127
    %v23 = vadd.s32 %v22, 128
    %s24 = smul.u32 0, 256
    %v25 = vstv %s24
    %v26 = vadd.s32 %v22, %v25
    %v27 = vadd.s32 %v23, %v25
    %vm28 = vcmp.lt.s32.totalorder %v26, 256
    %vm29 = vcmp.lt.s32.totalorder %v27, 256
    %v30 = vsel %vm28, 1, 0
    %v31 = vsel %vm29, 1, 0
    %vm32 = vcmp.eq.s32.totalorder %v30, 1
    %vm33 = vcmp.eq.s32.totalorder %v31, 1
    %v34 = vsel %vm32, %v12, 0.0
    %v35 = vsel %vm33, %v13, 0.0
    %v36 = vsel %vm32, %v14, 0.0
    %v37 = vsel %vm33, %v15, 0.0
    %v38 = vsel %vm32, %v16, 0.0
    %v39 = vsel %vm33, %v17, 0.0
    %v40 = vsel %vm32, %v18, 0.0
    %v41 = vsel %vm33, %v19, 0.0
    %vm42 = vcmask 1043456
    %v43 = vsel %vm42, %v36, -inf
    %v44 = vmax.f32 %v34, %v43
    %v45 = vrot.slane %v44, 4
    %v46 = vmax.f32 %v44, %v45
    %v47 = vrot.slane %v46, 2
    %v48 = vmax.f32 %v46, %v47
    %v49 = vrot.slane %v48, 1
    %v50 = vmax.f32 %v48, %v49
    %v51 = vsel %vm42, %v37, -inf
    %v52 = vmax.f32 %v35, %v51
    %v53 = vrot.slane %v52, 4
    %v54 = vmax.f32 %v52, %v53
    %v55 = vrot.slane %v54, 2
    %v56 = vmax.f32 %v54, %v55
    %v57 = vrot.slane %v56, 1
    %v58 = vmax.f32 %v56, %v57
    %v59 = vsel %vm42, %v40, -inf
    %v60 = vmax.f32 %v38, %v59
    %v61 = vrot.slane %v60, 4
    %v62 = vmax.f32 %v60, %v61
    %v63 = vrot.slane %v62, 2
    %v64 = vmax.f32 %v62, %v63
    %v65 = vrot.slane %v64, 1
    %v66 = vmax.f32 %v64, %v65
    %v67 = vsel %vm42, %v41, -inf
    %v68 = vmax.f32 %v39, %v67
    %v69 = vrot.slane %v68, 4
    %v70 = vmax.f32 %v68, %v69
    %v71 = vrot.slane %v70, 2
    %v72 = vmax.f32 %v70, %v71
    %v73 = vrot.slane %v72, 1
    %v74 = vmax.f32 %v72, %v73
    %v75 = vsub.f32 %v34, %v50
    %v76 = vsub.f32 %v35, %v58
    %v77 = vsub.f32 %v36, %v50
    %v78 = vsub.f32 %v37, %v58
    %v79 = vsub.f32 %v38, %v66
    %v80 = vsub.f32 %v39, %v74
    %v81 = vsub.f32 %v40, %v66
    %v82 = vsub.f32 %v41, %v74
    %v83 = vmul.f32 %v75, 1.442695
    %v84 = vpow.pop %v83
    %v85 = vmul.f32 %v76, 1.442695
    %v86 = vpow.pop %v85
    %v87 = vmul.f32 %v77, 1.442695
    %v88 = vpow.pop %v87
    %v89 = vmul.f32 %v78, 1.442695
    %v90 = vpow.pop %v89
    %v91 = vmul.f32 %v79, 1.442695
    %v92 = vpow.pop %v91
    %v93 = vmul.f32 %v80, 1.442695
    %v94 = vpow.pop %v93
    %v95 = vmul.f32 %v81, 1.442695
    %v96 = vpow.pop %v95
    %v97 = vmul.f32 %v82, 1.442695
    %v98 = vpow.pop %v97
    %v99 = vsel %vm42, %v88, 0.0
    %v100 = vadd.f32 %v84, %v99
    %v101 = vrot.slane %v100, 4
    %v102 = vadd.f32 %v100, %v101
    %v103 = vrot.slane %v102, 2
    %v104 = vadd.f32 %v102, %v103
    %v105 = vrot.slane %v104, 1
    %v106 = vadd.f32 %v104, %v105
    %v107 = vsel %vm42, %v90, 0.0
    %v108 = vadd.f32 %v86, %v107
    %v109 = vrot.slane %v108, 4
    %v110 = vadd.f32 %v108, %v109
    %v111 = vrot.slane %v110, 2
    %v112 = vadd.f32 %v110, %v111
    %v113 = vrot.slane %v112, 1
    %v114 = vadd.f32 %v112, %v113
    %v115 = vsel %vm42, %v96, 0.0
    %v116 = vadd.f32 %v92, %v115
    %v117 = vrot.slane %v116, 4
    %v118 = vadd.f32 %v116, %v117
    %v119 = vrot.slane %v118, 2
    %v120 = vadd.f32 %v118, %v119
    %v121 = vrot.slane %v120, 1
    %v122 = vadd.f32 %v120, %v121
    %v123 = vsel %vm42, %v98, 0.0
    %v124 = vadd.f32 %v94, %v123
    %v125 = vrot.slane %v124, 4
    %v126 = vadd.f32 %v124, %v125
    %v127 = vrot.slane %v126, 2
    %v128 = vadd.f32 %v126, %v127
    %v129 = vrot.slane %v128, 1
    %v130 = vadd.f32 %v128, %v129
    %v131 = vrcp.pop %v106
    %v132 = vmul.f32 1.0, %v131
    %v133 = vrcp.pop %v114
    %v134 = vmul.f32 1.0, %v133
    %v135 = vrcp.pop %v122
    %v136 = vmul.f32 1.0, %v135
    %v137 = vrcp.pop %v130
    %v138 = vmul.f32 1.0, %v137
    %v139 = vmul.f32 %v84, %v132
    %v140 = vmul.f32 %v86, %v134
    %v141 = vmul.f32 %v88, %v132
    %v142 = vmul.f32 %v90, %v134
    %v143 = vmul.f32 %v92, %v136
    %v144 = vmul.f32 %v94, %v138
    %v145 = vmul.f32 %v96, %v136
    %v146 = vmul.f32 %v98, %v138
    %v147 = vlaneseq
    %v148 = vshrl.u32 %v147, 7
    %v149 = vadd.s32 %v148, 8
    %v151 = vunpack.c.l.s4 1966171168
    %v152 = vunpack.c.0.s8 %v151
    %v153 = vlaneseq
    %v154 = vshrl.u32 %v153, 7
    %v155 = vsub.s32 %v152, %v154
    %v156 = vrot.slane %v20, %v155
    %v157 = vcombine.high %v156, %v156
    %v158 = vlaneseq
    %v159 = vshrl.u32 %v158, 7
    %v160 = vsub.s32 0, %v159
    %v161 = vrot.slane %v156, %v160
    %v162 = vlaneseq
    %v163 = vshrl.u32 %v162, 7
    %v164 = vsub.s32 1, %v163
    %v165 = vrot.slane %v156, %v164
    %v166 = vlaneseq
    %v167 = vshrl.u32 %v166, 7
    %v168 = vsub.s32 0, %v167
    %v169 = vrot.slane %v157, %v168
    %v170 = vlaneseq
    %v171 = vshrl.u32 %v170, 7
    %v172 = vsub.s32 1, %v171
    %v173 = vrot.slane %v157, %v172
    %vm174 = vcmp.eq.s32.totalorder %v148, %v161
    %vm175 = vcmp.eq.s32.totalorder %v148, %v165
    %vm176 = vcmp.eq.s32.totalorder %v149, %v161
    %vm177 = vcmp.eq.s32.totalorder %v149, %v165
    %vm178 = vcmp.eq.s32.totalorder %v148, %v169
    %vm179 = vcmp.eq.s32.totalorder %v148, %v173
    %vm180 = vcmp.eq.s32.totalorder %v149, %v169
    %vm181 = vcmp.eq.s32.totalorder %v149, %v173
    %v182 = vsel %vm174, 1, 0
    %v183 = vsel %vm175, 1, 0
    %v184 = vsel %vm176, 1, 0
    %v185 = vsel %vm177, 1, 0
    %v186 = vsel %vm178, 1, 0
    %v187 = vsel %vm179, 1, 0
    %v188 = vsel %vm180, 1, 0
    %v189 = vsel %vm181, 1, 0
    %v190 = vcvt.s32.f32 %v182
    %v191 = vcvt.s32.f32 %v183
    %v192 = vcvt.s32.f32 %v184
    %v193 = vcvt.s32.f32 %v185
    %v194 = vcvt.s32.f32 %v186
    %v195 = vcvt.s32.f32 %v187
    %v196 = vcvt.s32.f32 %v188
    %v197 = vcvt.s32.f32 %v189
    %v198 = vmul.f32 %v190, %v139
    %v199 = vmul.f32 %v191, %v140
    %v200 = vmul.f32 %v192, %v141
    %v201 = vmul.f32 %v193, %v142
    %v202 = vmul.f32 %v194, %v143
    %v203 = vmul.f32 %v195, %v144
    %v204 = vmul.f32 %v196, %v145
    %v205 = vmul.f32 %v197, %v146
    %v206 = vadd.f32 %v198, %v202
    %v207 = vadd.f32 %v199, %v203
    %v208 = vsel %vm42, %v200, 0.0
    %v209 = vsel %vm42, %v204, 0.0
    %v210 = vadd.f32 %v208, %v209
    %v211 = vsel %vm42, %v201, 0.0
    %v212 = vsel %vm42, %v205, 0.0
    %v213 = vadd.f32 %v211, %v212
    %v214 = vadd.f32 %v139, %v143
    %v215 = vadd.f32 %v140, %v144
    %v216 = vsel %vm42, %v141, 0.0
    %v217 = vsel %vm42, %v145, 0.0
    %v218 = vadd.f32 %v216, %v217
    %v219 = vsel %vm42, %v142, 0.0
    %v220 = vsel %vm42, %v146, 0.0
    %v221 = vadd.f32 %v219, %v220
    %v222 = vadd.f32 %v190, %v194
    %v223 = vadd.f32 %v191, %v195
    %v224 = vsel %vm42, %v192, 0.0
    %v225 = vsel %vm42, %v196, 0.0
    %v226 = vadd.f32 %v224, %v225
    %v227 = vsel %vm42, %v193, 0.0
    %v228 = vsel %vm42, %v197, 0.0
    %v229 = vadd.f32 %v227, %v228
    %v230 = vmul.f32 %v206, 2.0
    %v231 = vmul.f32 %v207, 2.0
    %v232 = vmul.f32 %v210, 2.0
    %v233 = vmul.f32 %v213, 2.0
    %v234 = vmul.f32 %v230, %v206
    %v235 = vmul.f32 %v231, %v207
    %v236 = vmul.f32 %v232, %v210
    %v237 = vmul.f32 %v233, %v213
    %v238 = vadd.f32 %v214, %v222
    %v239 = vadd.f32 %v215, %v223
    %v240 = vadd.f32 %v218, %v226
    %v241 = vadd.f32 %v221, %v229
    %v242 = vadd.f32 %v238, 2e-07
    %v243 = vadd.f32 %v239, 2e-07
    %v244 = vadd.f32 %v240, 2e-07
    %v245 = vadd.f32 %v241, 2e-07
    %v246 = vmul.f32 %v206, %v242
    %v247 = vmul.f32 %v207, %v243
    %v248 = vmul.f32 %v210, %v244
    %v249 = vmul.f32 %v213, %v245
    %v250 = vadd.f32 %v214, 1e-07
    %v251 = vadd.f32 %v215, 1e-07
    %v252 = vadd.f32 %v218, 1e-07
    %v253 = vadd.f32 %v221, 1e-07
    %v254 = vmul.f32 %v250, 1e-07
    %v255 = vmul.f32 %v251, 1e-07
    %v256 = vmul.f32 %v252, 1e-07
    %v257 = vmul.f32 %v253, 1e-07
    %v258 = vadd.f32 %v222, 1e-07
    %v259 = vadd.f32 %v223, 1e-07
    %v260 = vadd.f32 %v226, 1e-07
    %v261 = vadd.f32 %v229, 1e-07
    %v262 = vmul.f32 %v254, %v258
    %v263 = vmul.f32 %v255, %v259
    %v264 = vmul.f32 %v256, %v260
    %v265 = vmul.f32 %v257, %v261
    %v266 = vadd.f32 %v246, %v262
    %v267 = vadd.f32 %v247, %v263
    %v268 = vadd.f32 %v248, %v264
    %v269 = vadd.f32 %v249, %v265
    %v270 = vrcp.pop %v266
    %v271 = vmul.f32 %v234, %v270
    %v272 = vrcp.pop %v267
    %v273 = vmul.f32 %v235, %v272
    %v274 = vrcp.pop %v268
    %v275 = vmul.f32 %v236, %v274
    %v276 = vrcp.pop %v269
    %v277 = vmul.f32 %v237, %v276
    %v278 = vmax.f32 %v271, 1e-07
    %v279 = vmax.f32 %v273, 1e-07
    %v280 = vmax.f32 %v275, 1e-07
    %v281 = vmax.f32 %v277, 1e-07
    %v282 = vmin.f32 %v278, 0.9999999
    %v283 = vmin.f32 %v279, 0.9999999
    %v284 = vmin.f32 %v280, 0.9999999
    %v285 = vmin.f32 %v281, 0.9999999
    %v286 = vsel %vm42, %v284, 0.0
    %v287 = vadd.f32 %v282, %v286
    %v288 = vrot.slane %v287, 4
    %v289 = vadd.f32 %v287, %v288
    %v290 = vrot.slane %v289, 2
    %v291 = vadd.f32 %v289, %v290
    %v292 = vrot.slane %v291, 1
    %v293 = vadd.f32 %v291, %v292
    %v294 = vsel %vm42, %v285, 0.0
    %v295 = vadd.f32 %v283, %v294
    %v296 = vrot.slane %v295, 4
    %v297 = vadd.f32 %v295, %v296
    %v298 = vrot.slane %v297, 2
    %v299 = vadd.f32 %v297, %v298
    %v300 = vrot.slane %v299, 1
    %v301 = vadd.f32 %v299, %v300
    %v302 = vsel %vm28, %v293, 0.0
    %v303 = vsel %vm29, %v301, 0.0
    %v306 = vcombine.low %v302, %v303
    %v308 = vunpack.c.l.s4 1966171168
    %v309 = vunpack.c.0.s8 %v308
    %v310 = vlaneseq
    %v311 = vshrl.u32 %v310, 7
    %v312 = vsub.s32 %v309, %v311
    %v313 = vrot.slane %v306, %v312
    %v315 = vunpack.c.l.s4 1966171168
    %v316 = vunpack.c.0.s8 %v315
    %v317 = vlaneseq
    %v318 = vshrl.u32 %v317, 7
    %v319 = vsub.s32 %v316, %v318
    %v320 = vrot.slane %v313, %v319
    %v322 = vlaneseq
    %vm323 = vcmp.ge.s32.totalorder %v322, 0
    %vm324 = vcmp.lt.s32.totalorder %v322, 256
    %vm325 = vmand %vm323, %vm324
    %326 = vst.msk [vmem:[#allocation2] sm:$0x3] %vm325, %v320
    // Predicated region
    $region10: #{tpu_custom_call.1} parent=1 // pred_check
      _
    $region11: #{tpu_custom_call.1} parent=1 // pred_check_branch
      %328 = sbr.rel (0) target = $region13
    $region12: #{tpu_custom_call.1} parent=1 // pred_region
      %s330 = ssub.s32 32, 32
      %331 = vsyncadd [#allocation3], %s330
      %s333 = sshll.u32 [#allocation2], 4
      %s334 = int_to_ptr.vmem [resolvable:$true] %s333
      %336 = dma.vmem_to_hbm [thread:$0]  %s334, 32, %s2, [#allocation3]
    $region13: #{tpu_custom_call.1} parent=1 // pred_fallthru
      _
    // Predicated region
    $region14: #{tpu_custom_call.1} parent=1 // pred_check
      _
    $region15: #{tpu_custom_call.1} parent=1 // pred_check_branch
      %338 = sbr.rel (0) target = $region17
    $region16: #{tpu_custom_call.1} parent=1 // pred_region
      %339 = dma.done [#allocation3], 32
    $region17: #{tpu_custom_call.1} parent=1 // pred_fallthru
      _
    %340 = vsyncpa [#allocation3], 1

</llo_original>
